<compile_context>
chip_gen: v6e
topology: v6e:2x2x1
jax: 0.10.0
libtpu: 0.0.40
codegen_flags: <defaults>
</compile_context>

<pallas_src>
import functools
import math

import jax
import jax.numpy as jnp
from jax.experimental import pallas as pl
from jax.experimental.pallas import tpu as pltpu


def _tconv_kernel(x_ref, w_ref, b_ref, o_ref, *, c_out, act):
    """One grid step == one (batch, lane-tile) output block.

    x_ref : (1, K, TN)       bf16 im2col operand, K = kt*c_in (no in-kernel slicing)
    w_ref : (C_out_eff, K)   bf16 fused per-tap weights (align residual folded in)
    b_ref : (C_out_eff, 1)   f32 bias (align bias folded in)
    o_ref : (1, c_out, TN)   lane-dense output block
    """
    acc = jnp.dot(w_ref[...], x_ref[0], preferred_element_type=jnp.float32)
    acc = acc + b_ref[...]                       # (C_out_eff,1) -> broadcast over lanes

    if act == 'GLU':
        out = acc[:c_out] * jax.nn.sigmoid(acc[c_out:])   # c_out % 8 == 0 -> cheap sublane split
    elif act == 'sigmoid':
        out = jax.nn.sigmoid(acc)
    else:                                        # 'relu' (module default)
        out = jnp.maximum(acc, 0.0)

    o_ref[0] = out.astype(o_ref.dtype)


def temporal_conv_layer(x, conv_w, conv_b, align_w, align_b, *, kt, c_in,
                        c_out, act='relu', dilation=2, lane_tile=256,
                        out_dtype=jnp.float32):
    """x: (N, C_in, L, V) -> (N, C_out, L, V)  (front-padded conv => L_out == L)."""
    B, C_in, L, V = x.shape
    assert C_in == c_in
    c_out_eff = conv_w.shape[0]                  # c_out, or 2*c_out for GLU
    K = kt * c_in
    LV = L * V

    # ---- weight/bias folding in f32, then bf16 cast for the MXU -------------
    # conv_w: (c_out_eff, c_in, kt, 1) -> per-tap (kt, c_out_eff, c_in)
    w_taps = jnp.transpose(conv_w[..., 0], (2, 0, 1)).astype(jnp.float32)
    b = conv_b.astype(jnp.float32)
    if c_in > c_out:                             # Align = 1x1 conv
        A = align_w[:, :, 0, 0].astype(jnp.float32)          # (c_out, c_in)
        b_align = align_b.astype(jnp.float32)
    else:                                        # Align = identity / zero-pad
        A = jnp.eye(c_out, c_in, dtype=jnp.float32)
        b_align = jnp.zeros((c_out,), jnp.float32)
    # x_pad[:, t+(kt-1)*d, :] == x[:, t, :]  => residual folds into the last tap
    # (first c_out output rows for GLU, all rows otherwise).
    w_taps = w_taps.at[kt - 1, :c_out, :].add(A)
    b = b.at[:c_out].add(b_align).reshape(c_out_eff, 1)
    # (c_out_eff, kt*c_in): column block k == tap-k weight (matches x_cat rows).
    w_cat = jnp.transpose(w_taps, (1, 0, 2)).reshape(c_out_eff, K).astype(jnp.bfloat16)

    # ---- im2col operand (bf16): row block k holds the tap-k shifted input ---
    # slab_k[:, :, t, :] = x[:, :, t - (kt-1-k)*dilation, :]   (0 if t < shift)
    xb = x.astype(jnp.bfloat16)
    slabs = []
    for k in range(kt):
        shift = (kt - 1 - k) * dilation
        if shift == 0:
            slabs.append(xb)
        else:
            slabs.append(jnp.pad(xb[:, :, :L - shift, :],
                                 ((0, 0), (0, 0), (shift, 0), (0, 0))))
    x_cat = jnp.concatenate(slabs, axis=1).reshape(B, K, LV)
    # TODO(synk): for large / mem-bound L*V move this tap gather in-kernel (DMA
    # the kt shifted views of un-padded x into a VMEM scratch, L-tiled with a
    # (kt-1)*dilation halo) and size the lane tile against v7x's 64 MiB VMEM.

    # Lane tile: multiple of 128 that divides L*V (fallback: full row per block).
    tn = lane_tile if (LV % lane_tile == 0 and lane_tile % 128 == 0) else LV

    kernel = functools.partial(_tconv_kernel, c_out=c_out, act=act)

    out_flat = pl.pallas_call(
        kernel,
        out_shape=jax.ShapeDtypeStruct((B, c_out, LV), out_dtype),
        grid_spec=pltpu.PrefetchScalarGridSpec(
            num_scalar_prefetch=0,
            grid=(B, LV // tn),
            in_specs=[
                pl.BlockSpec((1, K, tn), lambda n, j: (n, 0, j)),       # im2col x
                pl.BlockSpec((c_out_eff, K), lambda n, j: (0, 0)),      # W (resident)
                pl.BlockSpec((c_out_eff, 1), lambda n, j: (0, 0)),      # bias (resident)
            ],
            out_specs=pl.BlockSpec((1, c_out, tn), lambda n, j: (n, 0, j)),
        ),
        compiler_params=pltpu.CompilerParams(
            dimension_semantics=("parallel", "parallel")),
    )(x_cat, w_cat, b)

    return out_flat.reshape(B, c_out, L, V)


def _reference_forward(x, conv_w, conv_b, align_w, align_b, *, kt, c_in,
                       c_out, act, dilation):
    """Pure-JAX f32 reference mirroring the PyTorch forward (no folding, no bf16)."""
    padding = (kt - 1) * dilation
    x_padded = jnp.pad(x, ((0, 0), (0, 0), (padding, 0), (0, 0)))
    l_out = x_padded.shape[2] - dilation * (kt - 1)
    x_conv = jnp.zeros((x.shape[0], conv_w.shape[0], l_out, x.shape[3]),
                       jnp.float32)
    for k in range(kt):                          # dilated-tap definition of Conv2d((kt,1))
        xk = jax.lax.slice_in_dim(x_padded, k * dilation,
                                  k * dilation + l_out, axis=2)
        x_conv = x_conv + jnp.einsum('oc,nclv->nolv', conv_w[:, :, k, 0], xk)
    x_conv = x_conv + conv_b[None, :, None, None]
    if c_in > c_out:
        x_al = (jnp.einsum('oc,nclv->nolv', align_w[:, :, 0, 0], x)
                + align_b[None, :, None, None])
    elif c_in < c_out:
        x_al = jnp.pad(x, ((0, 0), (0, c_out - c_in), (0, 0), (0, 0)))
    else:
        x_al = x
    x_in = x_al[:, :, :x_conv.shape[2], :]
    if act == 'GLU':
        return (x_conv[:, :c_out] + x_in) * jax.nn.sigmoid(x_conv[:, c_out:])
    elif act == 'sigmoid':
        return jax.nn.sigmoid(x_conv + x_in)
    return jnp.maximum(x_conv + x_in, 0.0)


if __name__ == "__main__":
    B, L, V = 2, 16, 32              # (batch, seq_len, num_nodes); L*V = 512 lanes
    kt, dilation = 3, 2
    key = jax.random.PRNGKey(0)

    configs = [
        dict(c_in=32, c_out=32, act='relu'),     # identity Align (module default act)
        dict(c_in=16, c_out=32, act='GLU'),      # zero-pad Align, gated conv
        dict(c_in=32, c_out=16, act='sigmoid'),  # 1x1-conv Align
    ]

    for cfg in configs:
        c_in, c_out, act = cfg['c_in'], cfg['c_out'], cfg['act']
        c_out_eff = 2 * c_out if act == 'GLU' else c_out
        key, kx, kw, kb, kaw, kab = jax.random.split(key, 6)

        x = jax.random.normal(kx, (B, c_in, L, V), jnp.float32)
        kbound = 1.0 / math.sqrt(c_in * kt)      # ~ PyTorch Conv2d default init scale
        conv_w = jax.random.uniform(kw, (c_out_eff, c_in, kt, 1),
                                    jnp.float32, -kbound, kbound)
        conv_b = jax.random.uniform(kb, (c_out_eff,), jnp.float32,
                                    -kbound, kbound)
        abound = 1.0 / math.sqrt(c_in)
        align_w = jax.random.uniform(kaw, (c_out, c_in, 1, 1),
                                     jnp.float32, -abound, abound)
        align_b = jax.random.uniform(kab, (c_out,), jnp.float32,
                                     -abound, abound)

        out = temporal_conv_layer(x, conv_w, conv_b, align_w, align_b,
                                  kt=kt, c_in=c_in, c_out=c_out, act=act,
                                  dilation=dilation)
        out = jax.block_until_ready(out)

        ref = _reference_forward(x, conv_w, conv_b, align_w, align_b,
                                 kt=kt, c_in=c_in, c_out=c_out, act=act,
                                 dilation=dilation)
        assert out.shape == ref.shape == (B, c_out, L, V), (out.shape, ref.shape)
        assert bool(jnp.all(jnp.isfinite(out)))
        max_err = float(jnp.max(jnp.abs(out - ref)))
        # bf16 MXU operands (f32 accumulation) -> tolerance relaxed vs f32 path.
        assert jnp.allclose(out, ref, rtol=3e-2, atol=5e-2), (act, max_err)

    print("KERNEL_OK")
</pallas_src>

<mosaic_0001>
module attributes {stable_mosaic.version = 11 : i64} {
  func.func @_tconv_kernel(%arg0: i32, %arg1: i32, %arg2: memref<1x96x256xbf16, #tpu.memory_space<vmem>>, %arg3: memref<32x96xbf16, #tpu.memory_space<vmem>>, %arg4: memref<32x1xf32, #tpu.memory_space<vmem>>, %arg5: memref<1x32x256xf32, #tpu.memory_space<vmem>>) attributes {dimension_semantics = [#tpu.dimension_semantics<parallel>, #tpu.dimension_semantics<parallel>], iteration_bounds = array<i64: 2, 2>, scalar_prefetch = 0 : i64, scratch_operands = 0 : i64, tpu.core_type = #tpu.core_type<tc>, window_params = [{transform_indices = @transform_0, window_bounds = array<i64: 1, 96, 256>}, {pipeline_mode = #tpu.pipeline_mode<synchronous>, transform_indices = @transform_1, window_bounds = array<i64: 32, 96>}, {pipeline_mode = #tpu.pipeline_mode<synchronous>, transform_indices = @transform_2, window_bounds = array<i64: 32, 1>}, {transform_indices = @transform_3, window_bounds = array<i64: 1, 32, 256>}]} {
    %c0 = arith.constant 0 : index
    %c0_0 = arith.constant 0 : index
    %0 = vector.load %arg3[%c0, %c0_0] : memref<32x96xbf16, #tpu.memory_space<vmem>>, vector<32x96xbf16>
    %c0_1 = arith.constant 0 : index
    %c0_2 = arith.constant 0 : index
    %c0_3 = arith.constant 0 : index
    %1 = vector.load %arg2[%c0_1, %c0_2, %c0_3] : memref<1x96x256xbf16, #tpu.memory_space<vmem>>, vector<1x96x256xbf16>
    %2 = vector.shape_cast %1 : vector<1x96x256xbf16> to vector<96x256xbf16>
    %cst = arith.constant dense<0.000000e+00> : vector<32x256xf32>
    %3 = tpu.matmul %0, %2, %cst {dimension_numbers = #tpu.dot_dimension_numbers<[1], [0], [0], [1], [0, 0, 1, 1], [], []>} : vector<32x96xbf16>, vector<96x256xbf16>, vector<32x256xf32> -> vector<32x256xf32>
    %c0_4 = arith.constant 0 : index
    %c0_5 = arith.constant 0 : index
    %4 = vector.load %arg4[%c0_4, %c0_5] : memref<32x1xf32, #tpu.memory_space<vmem>>, vector<32x1xf32>
    %5 = vector.broadcast %4 : vector<32x1xf32> to vector<32x256xf32>
    %6 = arith.addf %3, %5 : vector<32x256xf32>
    %cst_6 = arith.constant 0.000000e+00 : f32
    %7 = vector.broadcast %cst_6 : f32 to vector<32x256xf32>
    %8 = arith.maximumf %6, %7 : vector<32x256xf32>
    %c0_7 = arith.constant 0 : index
    %c0_8 = arith.constant 0 : index
    %c0_9 = arith.constant 0 : index
    %9 = vector.load %arg5[%c0_7, %c0_8, %c0_9] : memref<1x32x256xf32, #tpu.memory_space<vmem>>, vector<1x32x256xf32>
    %10 = vector.shape_cast %9 : vector<1x32x256xf32> to vector<32x256xf32>
    %11 = vector.shape_cast %8 : vector<32x256xf32> to vector<1x32x256xf32>
    tpu.vector_store %arg5[%c0_7, %c0_8, %c0_9], %11 {strides = array<i32>} : memref<1x32x256xf32, #tpu.memory_space<vmem>>, vector<1x32x256xf32>,
    return
  }
  func.func @transform_0(%arg0: i32, %arg1: i32) -> (i32, i32, i32) {
    %c0_i32 = arith.constant 0 : i32
    %c0_i32_0 = arith.constant 0 : i32
    return %arg0, %c0_i32, %arg1 : i32, i32, i32
  }
  func.func @transform_1(%arg0: i32, %arg1: i32) -> (i32, i32) {
    %c0_i32 = arith.constant 0 : i32
    %c0_i32_0 = arith.constant 0 : i32
    %c0_i32_1 = arith.constant 0 : i32
    return %c0_i32, %c0_i32_0 : i32, i32
  }
  func.func @transform_2(%arg0: i32, %arg1: i32) -> (i32, i32) {
    %c0_i32 = arith.constant 0 : i32
    %c0_i32_0 = arith.constant 0 : i32
    %c0_i32_1 = arith.constant 0 : i32
    return %c0_i32, %c0_i32_0 : i32, i32
  }
  func.func @transform_3(%arg0: i32, %arg1: i32) -> (i32, i32, i32) {
    %c0_i32 = arith.constant 0 : i32
    %c0_i32_0 = arith.constant 0 : i32
    return %arg0, %c0_i32, %arg1 : i32, i32, i32
  }
}

</mosaic_0001>

<llo_original>
// kernel: tpu_custom_call.1
$region0: #{tpu_custom_call.1}
  #allocation0 [shape = 'u32[]', space=smem, size = 0x4, offset = 0x4, fixed_abs, tag = 'smem constant byte address 0x4 - core index']
  #allocation1 [shape = 'u32[144,128]{1,0:T(1,128)}', space=vmem, size = 0x12000, scoped, tag = 'internal scratch']
  %s0 = inlined_call_operand.hbm [shape: bf16[2,96,512], index: 0, kind: input, shape index: {}]
  %s1 = inlined_call_operand.vmem [shape: bf16[32,96], index: 1, kind: input, shape index: {}]
  %s2 = inlined_call_operand.vmem [shape: f32[32,1], index: 2, kind: input, shape index: {}]
  %s3 = inlined_call_operand.hbm [shape: f32[2,32,512], index: 3, kind: output, shape index: {}]
  %s4 = sld [smem:[#allocation0]]
  $region49: #{tpu_custom_call.1} parent=0
    _
  %s6 = ssub.s32 1, %s4
  %s7 = scalar_select 0, %s6, %s4
  $region1: #{tpu_custom_call.1} parent=0
    #allocation2 [shape = 'u8[98304]{0}', space=vmem, size = 0x18000, scoped, tag = 'input window, operand 0']
    #allocation3 [shape = 's32[2]{0}', space=sflag, size = 0x8, scoped, tag = 'scoped memory for tpu_custom_call.1']
    #allocation4 [shape = 's32[2]{0}', space=sflag, size = 0x8, scoped, tag = 'scoped memory for tpu_custom_call.1']
    #allocation5 [shape = 'u8[65536]{0}', space=vmem, size = 0x10000, scoped, tag = 'output window, operand 0']
    %8 = vsyncpa [#allocation3], 0
    %s9 = scalar_lea.sflag [#allocation3], 1
    %10 = vsyncpa %s9, 0
    %11 = vsyncpa [#allocation4], 0
    %s12 = scalar_lea.sflag [#allocation4], 1
    %13 = vsyncpa %s12, 0
    loop: start=0, step=1, limit=6
    $region2: #{tpu_custom_call.1} parent=1 // loop_pre_header
      _
    $region3: #{tpu_custom_call.1} parent=1 // loop_header
      %s15 = sphi 0, %s19
      %p16 = scmp.ge.s32.totalorder %s15, 6
      %s22 = sphi 0, %s34
      %s23 = sphi 0, %s30
      %s24 = sphi 0, %s22
      %s25 = sphi 0, %s23
      %s26 = sphi 0, %s24
      %s27 = sphi 0, %s25
      %s39 = sphi 0, %s41
      %s42 = sphi 0, %s39
      %s43 = sphi 0, %s42
      %s59 = sphi 0, %s43
      %s63 = sphi 0, %s63
      %s65 = sphi 0, %s63
      %s66 = sphi 0, %s65
      %s80 = sphi 0, %s66
      %s84 = sphi 0, %s84
      %s86 = sphi 0, %s84
      %s87 = sphi 0, %s86
      %s101 = sphi 0, %s87
      %s109 = sphi 0, %s111
      %s112 = sphi 0, %s109
      %s113 = sphi 0, %s112
      %s129 = sphi 0, %s113
    $region4: #{tpu_custom_call.1} parent=1 // loop_header_branch
      %18 = sbr.rel (%p16) target = $region8
    $region5: #{tpu_custom_call.1} parent=1 // loop_body
      %s20 = ssub.s32 %s15, 1
      %s21 = ssub.s32 %s15, 2
      %s28 = sadd.s32 1, %s23
      %p29 = scmp.ge.s32.totalorder %s28, 2
      %s30 = scalar_select %p29, 0, %s28
      %s31 = sadd.s32 1, %s22
      %s32 = scalar_select %p29, %s31, %s22
      %p33 = scmp.ge.s32.totalorder %s32, 2
      %s34 = scalar_select %p33, 0, %s32
      %s35 = ssub.s32 %s22, %s34
      %s36 = ssub.s32 %s23, %s30
      %s37 = sor.u32 %s35, %s36
      %p38 = scmp.eq.s32.totalorder %s37, 0
      %s40 = sadd.s32 %s39, 1
      %s41 = scalar_select %p38, %s39, %s40
      %p44 = pneg %p38
      %p45 = scmp.eq.s32.totalorder %s15, 3
      %p46 = por %p44, %p45
      %p47 = scmp.ne.s32.totalorder %s39, %s42
      %p48 = scmp.eq.s32.totalorder %s15, 0
      %p49 = por %p47, %p48
      %p50 = scmp.ne.s32.totalorder %s39, %s42
      %p51 = scmp.eq.s32.totalorder %s20, 3
      %p52 = por %p50, %p51
      %p53 = scmp.ne.s32.totalorder %s42, %s43
      %p54 = scmp.eq.s32.totalorder %s20, 0
      %p55 = por %p53, %p54
      %p56 = scmp.ne.s32.totalorder %s42, %s43
      %p57 = scmp.eq.s32.totalorder %s21, 3
      %p58 = por %p56, %p57
      %p60 = scmp.ne.s32.totalorder %s43, %s59
      %p61 = scmp.eq.s32.totalorder %s21, 0
      %p62 = por %p60, %p61
      %s64 = sadd.s32 %s63, 1
      %p67 = scmp.eq.s32.totalorder %s15, 3
      %p68 = scmp.ne.s32.totalorder %s63, %s65
      %p69 = scmp.eq.s32.totalorder %s15, 0
      %p70 = por %p68, %p69
      %p71 = scmp.ne.s32.totalorder %s63, %s65
      %p72 = scmp.eq.s32.totalorder %s20, 3
      %p73 = por %p71, %p72
      %p74 = scmp.ne.s32.totalorder %s65, %s66
      %p75 = scmp.eq.s32.totalorder %s20, 0
      %p76 = por %p74, %p75
      %p77 = scmp.ne.s32.totalorder %s65, %s66
      %p78 = scmp.eq.s32.totalorder %s21, 3
      %p79 = por %p77, %p78
      %p81 = scmp.ne.s32.totalorder %s66, %s80
      %p82 = scmp.eq.s32.totalorder %s21, 0
      %p83 = por %p81, %p82
      %s85 = sadd.s32 %s84, 1
      %p88 = scmp.eq.s32.totalorder %s15, 3
      %p89 = scmp.ne.s32.totalorder %s84, %s86
      %p90 = scmp.eq.s32.totalorder %s15, 0
      %p91 = por %p89, %p90
      %p92 = scmp.ne.s32.totalorder %s84, %s86
      %p93 = scmp.eq.s32.totalorder %s20, 3
      %p94 = por %p92, %p93
      %p95 = scmp.ne.s32.totalorder %s86, %s87
      %p96 = scmp.eq.s32.totalorder %s20, 0
      %p97 = por %p95, %p96
      %p98 = scmp.ne.s32.totalorder %s86, %s87
      %p99 = scmp.eq.s32.totalorder %s21, 3
      %p100 = por %p98, %p99
      %p102 = scmp.ne.s32.totalorder %s87, %s101
      %p103 = scmp.eq.s32.totalorder %s21, 0
      %p104 = por %p102, %p103
      %s105 = ssub.s32 %s22, %s34
      %s106 = ssub.s32 %s23, %s30
      %s107 = sor.u32 %s105, %s106
      %p108 = scmp.eq.s32.totalorder %s107, 0
      %s110 = sadd.s32 %s109, 1
      %s111 = scalar_select %p108, %s109, %s110
      %p114 = pneg %p108
      %p115 = scmp.eq.s32.totalorder %s15, 3
      %p116 = por %p114, %p115
      %p117 = scmp.ne.s32.totalorder %s109, %s112
      %p118 = scmp.eq.s32.totalorder %s15, 0
      %p119 = por %p117, %p118
      %p120 = scmp.ne.s32.totalorder %s109, %s112
      %p121 = scmp.eq.s32.totalorder %s20, 3
      %p122 = por %p120, %p121
      %p123 = scmp.ne.s32.totalorder %s112, %s113
      %p124 = scmp.eq.s32.totalorder %s20, 0
      %p125 = por %p123, %p124
      %p126 = scmp.ne.s32.totalorder %s112, %s113
      %p127 = scmp.eq.s32.totalorder %s21, 3
      %p128 = por %p126, %p127
      %p130 = scmp.ne.s32.totalorder %s113, %s129
      %p131 = scmp.eq.s32.totalorder %s21, 0
      %p132 = por %p130, %p131
      %p133 = scmp.le.s32.totalorder 1, %s15
      %p134 = scmp.lt.s32.totalorder %s15, 5
      %p135 = pnand %p133, %p134
      %p136 = pneg %p135
      // Predicated region
      $region9: #{tpu_custom_call.1} parent=5 // pred_check
        _
      $region10: #{tpu_custom_call.1} parent=5 // pred_check_branch
        %138 = sbr.rel (%p135) target = $region12
      $region11: #{tpu_custom_call.1} parent=5 // pred_region
        %s139 = ssub.s32 %s15, 1
        // Predicated region
        $region13: #{tpu_custom_call.1} parent=11 // pred_check
          %p140 = pneg %p76
        $region14: #{tpu_custom_call.1} parent=11 // pred_check_branch
          %142 = sbr.rel (%p140) target = $region16
        $region15: #{tpu_custom_call.1} parent=11 // pred_region
          _
        $region16: #{tpu_custom_call.1} parent=11 // pred_fallthru
          _
        // Predicated region
        $region17: #{tpu_custom_call.1} parent=11 // pred_check
          %p143 = pneg %p97
        $region18: #{tpu_custom_call.1} parent=11 // pred_check_branch
          %145 = sbr.rel (%p143) target = $region20
        $region19: #{tpu_custom_call.1} parent=11 // pred_region
          _
        $region20: #{tpu_custom_call.1} parent=11 // pred_fallthru
          _
      $region12: #{tpu_custom_call.1} parent=5 // pred_fallthru
        _
      %p146 = scmp.lt.s32.totalorder %s15, 4
      // Predicated region
      $region21: #{tpu_custom_call.1} parent=5 // pred_check
        %p147 = pneg %p146
      $region22: #{tpu_custom_call.1} parent=5 // pred_check_branch
        %149 = sbr.rel (%p147) target = $region24
      $region23: #{tpu_custom_call.1} parent=5 // pred_region
        // Predicated region
        $region25: #{tpu_custom_call.1} parent=23 // pred_check
          %p150 = pneg %p49
        $region26: #{tpu_custom_call.1} parent=23 // pred_check_branch
          %152 = sbr.rel (%p150) target = $region28
        $region27: #{tpu_custom_call.1} parent=23 // pred_region
          %s153 = sand.u32 %s39, 1
          %s154 = scalar_lea.sflag [#allocation3], %s153
          %s155 = sand.u32 %s39, 1
          %s156 = smul.addr %s155, 96
          %s157 = scalar_lea.vmem [#allocation2], %s156
          %s158 = smul.u32 2, %s23
          %s160 = ssub.s32 1536, 1536
          %161 = vsyncadd %s154, %s160
          %s162 = smul.addr %s22, 48
          %s163 = sadd.s32 %s158, %s162
          %s164 = smul.addr %s163, 64
          %s165 = scalar_lea.hbm %s0, %s164
          %s166 = sshll.u32 %s157, 4
          %s167 = int_to_ptr.vmem [resolvable:$true] %s166
          %172 = dma.hbm_to_vmem [thread:$0]  %s165, 1536, %s167, %s154, 256, 128, 8
        $region28: #{tpu_custom_call.1} parent=23 // pred_fallthru
          _
      $region24: #{tpu_custom_call.1} parent=5 // pred_fallthru
        _
      %p173 = scmp.le.s32.totalorder 1, %s15
      %p174 = scmp.lt.s32.totalorder %s15, 5
      %p175 = pnand %p173, %p174
      %p176 = pneg %p175
      // Predicated region
      $region29: #{tpu_custom_call.1} parent=5 // pred_check
        _
      $region30: #{tpu_custom_call.1} parent=5 // pred_check_branch
        %178 = sbr.rel (%p175) target = $region32
      $region31: #{tpu_custom_call.1} parent=5 // pred_region
        %s179 = ssub.s32 %s15, 1
        %s180 = sand.u32 %s42, 1
        %s181 = scalar_lea.sflag [#allocation3], %s180
        %s182 = sand.u32 %s42, 1
        %s183 = smul.addr %s182, 96
        %s184 = scalar_lea.vmem [#allocation2], %s183
        // Predicated region
        $region33: #{tpu_custom_call.1} parent=31 // pred_check
          %p185 = pneg %p55
        $region34: #{tpu_custom_call.1} parent=31 // pred_check_branch
          %187 = sbr.rel (%p185) target = $region36
        $region35: #{tpu_custom_call.1} parent=31 // pred_region
          %188 = dma.done %s181, 1536
        $region36: #{tpu_custom_call.1} parent=31 // pred_fallthru
          _
        %s189 = sand.u32 %s42, 1
        %s190 = scalar_lea.sflag [#allocation3], %s189
        %s191 = sand.u32 %s42, 1
        %s192 = smul.addr %s191, 96
        %s193 = scalar_lea.vmem [#allocation2], %s192
        %p194 = pneg %p55
        %p195 = pneg %p52
        %p196 = pneg %p76
        %p197 = pneg %p73
        %p198 = pneg %p97
        %p199 = pneg %p94
        %p200 = pneg %p125
        %p201 = pneg %p122
        %s202 = sand.u32 %s112, 1
        %s203 = scalar_lea.sflag [#allocation4], %s202
        %s204 = sand.u32 %s112, 1
        %s205 = smul.addr %s204, 64
        %s206 = scalar_lea.vmem [#allocation5], %s205
        %s207 = smul.u32 2, %s25
        %s208 = smul.u32 2, %s25
        %v210 = vld [vmem:[%s1] sm:$0xf]
        %v211 = vld [vmem:[%s1 + $0x4] sm:$0xf]
        %v212 = vld [vmem:[%s1 + $0x8] sm:$0xf]
        %v213 = vld [vmem:[%s1 + $0xc] sm:$0xf]
        %v214 = vld [vmem:[%s184] sm:$0xff]
        %v215 = vld [vmem:[%s184 + $0x8] sm:$0xff]
        %v216 = vld [vmem:[%s184 + $0x10] sm:$0xff]
        %v217 = vld [vmem:[%s184 + $0x18] sm:$0xff]
        %v218 = vld [vmem:[%s184 + $0x20] sm:$0xff]
        %v219 = vld [vmem:[%s184 + $0x28] sm:$0xff]
        %v220 = vld [vmem:[%s184 + $0x30] sm:$0xff]
        %v221 = vld [vmem:[%s184 + $0x38] sm:$0xff]
        %v222 = vld [vmem:[%s184 + $0x40] sm:$0xff]
        %v223 = vld [vmem:[%s184 + $0x48] sm:$0xff]
        %v224 = vld [vmem:[%s184 + $0x50] sm:$0xff]
        %v225 = vld [vmem:[%s184 + $0x58] sm:$0xff]
        %v226 = vld [vmem:[%s2] sm:$0xff]
        %v227 = vld [vmem:[%s2 + $0x8] sm:$0xff]
        %v228 = vld [vmem:[%s2 + $0x10] sm:$0xff]
        %v229 = vld [vmem:[%s2 + $0x18] sm:$0xff]
        %231 = vset.pattern.permute.xlu0 0
        %232 = vperm.xlu0 %231, %v226
        %v233 = vpop.permute.xlu0 %232
        %236 = vset.pattern.permute.xlu0 0
        %237 = vperm.xlu0 %236, %v227
        %v238 = vpop.permute.xlu0 %237
        %241 = vset.pattern.permute.xlu0 0
        %242 = vperm.xlu0 %241, %v228
        %v243 = vpop.permute.xlu0 %242
        %246 = vset.pattern.permute.xlu0 0
        %247 = vperm.xlu0 %246, %v229
        %v248 = vpop.permute.xlu0 %247
        %v254 = vunpack.c.l.b16 %v210
        %v255 = vunpack.c.l.b16 %v211
        %v256 = vunpack.c.l.b16 %v212
        %v257 = vunpack.c.l.b16 %v213
        %v258 = vpack.c.b16 %v255, %v254
        %v259 = vpack.c.b16 %v257, %v256
        %v272 = vunpack.c.l.b16 %v214
        %v273 = vunpack.c.h.b16 %v214
        %v274 = vunpack.c.l.b16 %v215
        %v275 = vunpack.c.h.b16 %v215
        %v276 = vunpack.c.l.b16 %v216
        %v277 = vunpack.c.h.b16 %v216
        %v278 = vunpack.c.l.b16 %v217
        %v279 = vunpack.c.h.b16 %v217
        %v280 = vunpack.c.l.b16 %v218
        %v281 = vunpack.c.h.b16 %v218
        %v282 = vunpack.c.l.b16 %v219
        %v283 = vunpack.c.h.b16 %v219
        %v284 = vunpack.c.l.b16 %v220
        %v285 = vunpack.c.h.b16 %v220
        %v286 = vunpack.c.l.b16 %v221
        %v287 = vunpack.c.h.b16 %v221
        %v288 = vunpack.c.l.b16 %v222
        %v289 = vunpack.c.h.b16 %v222
        %v290 = vunpack.c.l.b16 %v223
        %v291 = vunpack.c.h.b16 %v223
        %v292 = vunpack.c.l.b16 %v224
        %v293 = vunpack.c.h.b16 %v224
        %v294 = vunpack.c.l.b16 %v225
        %v295 = vunpack.c.h.b16 %v225
        %v296 = vpack.c.b16 %v274, %v272
        %v297 = vpack.c.b16 %v275, %v273
        %v298 = vpack.c.b16 %v278, %v276
        %v299 = vpack.c.b16 %v279, %v277
        %v300 = vpack.c.b16 %v282, %v280
        %v301 = vpack.c.b16 %v283, %v281
        %v302 = vpack.c.b16 %v286, %v284
        %v303 = vpack.c.b16 %v287, %v285
        %v304 = vpack.c.b16 %v290, %v288
        %v305 = vpack.c.b16 %v291, %v289
        %v306 = vpack.c.b16 %v294, %v292
        %v307 = vpack.c.b16 %v295, %v293
        %vm320 = vcmask 785408
        %v322 = vsel %vm320, %v258, 0
        %v325 = vsel %vm320, %v259, 0
        %327 = vmatprep.subr.bf16.mxu0 0
        %328 = vmatpush1.bf16.msra.mxu0 0
        %329 = vmatprep.subr.bf16.mxu0 0
        %330 = vmatpush1.bf16.msra.mxu0 0
        %331 = vmatprep.subr.bf16.mxu0 %v307
        %332 = vmatpush1.bf16.msra.mxu0 %v306
        %333 = vmatprep.subr.bf16.mxu0 %v305
        %334 = vmatpush1.bf16.msra.mxu0 %v304
        %335 = vmatprep.subr.bf16.mxu0 %v303
        %336 = vmatpush1.bf16.msra.mxu0 %v302
        %337 = vmatprep.subr.bf16.mxu0 %v301
        %338 = vmatpush1.bf16.msra.mxu0 %v300
        %339 = vmatprep.subr.bf16.mxu0 %v299
        %340 = vmatpush1.bf16.msra.mxu0 %v298
        %341 = vmatprep.subr.bf16.mxu0 %v297
        %342 = vmatpush1.bf16.msra.mxu0 %v296
        %343 = vmatprep.subr.bf16.mxu0 0
        %344 = vmatpush2.bf16.msra.mxu0 0
        %345 = vmatprep.subr.bf16.mxu0 0
        %346 = vmatpush2.bf16.msra.mxu0 0
        %347 = vmatprep.subr.bf16.mxu0 0
        %348 = vmatpush2.bf16.msra.mxu0 0
        %349 = vmatprep.subr.bf16.mxu0 0
        %350 = vmatpush2.bf16.msra.mxu0 0
        %351 = vmatprep.subr.bf16.mxu0 0
        %352 = vmatpush2.bf16.msra.mxu0 0
        %353 = vmatprep.subr.bf16.mxu0 0
        %354 = vmatpush2.bf16.msra.mxu0 0
        %355 = vmatprep.subr.bf16.mxu0 0
        %356 = vmatpush2.bf16.msra.mxu0 0
        %357 = vmatprep.subr.bf16.mxu0 0
        %358 = vmatpush2.bf16.msra.mxu0 0
        %359 = vmatprep.mubr.bf16.mxu0 0
        %360 = vmatmul.mubr.bf16.gmra.mxu0 %v322
        %v361 = vpop.f32.mrf.mxu0
        %v362 = vadd.f32 %v233, %v361
        %v363 = vpop.f32.mrf.mxu0
        %v364 = vadd.f32 %v233, %v363
        %v365 = vpop.f32.mrf.mxu0
        %v366 = vadd.f32 %v238, %v365
        %v367 = vpop.f32.mrf.mxu0
        %v368 = vadd.f32 %v238, %v367
        %369 = vmatprep.mubr.bf16.mxu0 0
        %370 = vmatmul.mubr.bf16.gmra.mxu0 %v325
        %v371 = vpop.f32.mrf.mxu0
        %v372 = vadd.f32 %v243, %v371
        %v373 = vpop.f32.mrf.mxu0
        %v374 = vadd.f32 %v243, %v373
        %v375 = vpop.f32.mrf.mxu0
        %v376 = vadd.f32 %v248, %v375
        %v377 = vpop.f32.mrf.mxu0
        %v378 = vadd.f32 %v248, %v377
        %379 = vdwg.mxu0
        %v380 = vmax.f32 %v362, 0.0
        %v381 = vmax.f32 %v364, 0.0
        %v382 = vmax.f32 %v366, 0.0
        %v383 = vmax.f32 %v368, 0.0
        %v384 = vmax.f32 %v372, 0.0
        %v385 = vmax.f32 %v374, 0.0
        %v386 = vmax.f32 %v376, 0.0
        %v387 = vmax.f32 %v378, 0.0
        %388 = vst [vmem:[%s206] sm:$0xff] %v380
        %389 = vst [vmem:[%s206 + $0x8] sm:$0xff] %v381
        %390 = vst [vmem:[%s206 + $0x10] sm:$0xff] %v382
        %391 = vst [vmem:[%s206 + $0x18] sm:$0xff] %v383
        %392 = vst [vmem:[%s206 + $0x20] sm:$0xff] %v384
        %393 = vst [vmem:[%s206 + $0x28] sm:$0xff] %v385
        %394 = vst [vmem:[%s206 + $0x30] sm:$0xff] %v386
        %395 = vst [vmem:[%s206 + $0x38] sm:$0xff] %v387
        %s396 = sand.u32 %s112, 1
        %s397 = scalar_lea.sflag [#allocation4], %s396
        %s398 = sand.u32 %s112, 1
        %s399 = smul.addr %s398, 64
        %s400 = scalar_lea.vmem [#allocation5], %s399
        // Predicated region
        $region37: #{tpu_custom_call.1} parent=31 // pred_check
          %p401 = pneg %p122
        $region38: #{tpu_custom_call.1} parent=31 // pred_check_branch
          %403 = sbr.rel (%p401) target = $region40
        $region39: #{tpu_custom_call.1} parent=31 // pred_region
          %s404 = smul.u32 2, %s25
          %s406 = ssub.s32 1024, 1024
          %407 = vsyncadd %s397, %s406
          %s408 = smul.addr %s24, 16
          %s409 = sadd.s32 %s404, %s408
          %s410 = smul.addr %s409, 128
          %s411 = scalar_lea.hbm %s3, %s410
          %s412 = sshll.u32 %s400, 4
          %s413 = int_to_ptr.vmem [resolvable:$true] %s412
          %418 = dma.vmem_to_hbm [thread:$0]  %s413, 1024, %s411, %s397, 256, 512, 16
        $region40: #{tpu_custom_call.1} parent=31 // pred_fallthru
          _
      $region32: #{tpu_custom_call.1} parent=5 // pred_fallthru
        _
      %p419 = scmp.le.s32.totalorder 2, %s15
      // Predicated region
      $region41: #{tpu_custom_call.1} parent=5 // pred_check
        %p420 = pneg %p419
      $region42: #{tpu_custom_call.1} parent=5 // pred_check_branch
        %422 = sbr.rel (%p420) target = $region44
      $region43: #{tpu_custom_call.1} parent=5 // pred_region
        %s423 = ssub.s32 %s15, 2
        // Predicated region
        $region45: #{tpu_custom_call.1} parent=43 // pred_check
          %p424 = pneg %p128
        $region46: #{tpu_custom_call.1} parent=43 // pred_check_branch
          %426 = sbr.rel (%p424) target = $region48
        $region47: #{tpu_custom_call.1} parent=43 // pred_region
          %s427 = sand.u32 %s113, 1
          %s428 = scalar_lea.sflag [#allocation4], %s427
          %s429 = sand.u32 %s113, 1
          %s430 = smul.addr %s429, 64
          %s431 = scalar_lea.vmem [#allocation5], %s430
          %432 = dma.done %s428, 1024
        $region48: #{tpu_custom_call.1} parent=43 // pred_fallthru
          _
      $region44: #{tpu_custom_call.1} parent=5 // pred_fallthru
        _
    $region6: #{tpu_custom_call.1} parent=1 // loop_footer
      %s19 = sadd.s32 1, %s15
    $region7: #{tpu_custom_call.1} parent=1 // loop_footer_branch
      %14 = sbr.rel target = $region3
    $region8: #{tpu_custom_call.1} parent=1 // loop_exit
      _
    %433 = vsyncpa [#allocation3], 1
    %s434 = scalar_lea.sflag [#allocation3], 1
    %435 = vsyncpa %s434, 1
    %436 = vsyncpa [#allocation4], 1
    %s437 = scalar_lea.sflag [#allocation4], 1
    %438 = vsyncpa %s437, 1

</llo_original>
